<compile_context>
chip_gen: v7x
topology: tpu7x:2x2x1
jax: 0.10.0
libtpu: 0.0.40
codegen_flags: <defaults>
</compile_context>

<pallas_src>
import jax
import jax.numpy as jnp
from jax.experimental import pallas as pl
from jax.experimental.pallas import tpu as pltpu


def _mlp_kernel(x_ref, w1_ref, b1_ref, w2_ref, b2_ref, w3_ref, b3_ref, o_ref):
    # x tile: [TB, D] streamed from HBM in its native dtype; cast to bf16 on the
    # VPU (plenty of VALU slack; avoids a separate wrapper-side cast pass).
    x = x_ref[...].astype(jnp.bfloat16)

    # fc1 + relu (MXU, bf16 inputs, f32 accumulate). dropout1: identity (eval).
    h1 = jnp.dot(x, w1_ref[...], preferred_element_type=jnp.float32) + b1_ref[...]
    h1 = jnp.maximum(h1, 0.0)                                   # [TB, 128] f32

    # fc2 + relu (MXU). dropout2: identity (eval).
    h2 = jnp.dot(h1.astype(jnp.bfloat16), w2_ref[...],
                 preferred_element_type=jnp.float32) + b2_ref[...]
    h2 = jnp.maximum(h2, 0.0)                                   # [TB, 64] f32

    # fc3 (out_features = 1): contract the 64-dim with the rhs "transposed"
    # (A @ B^T form) so the result lands lane-major as [1, TB] -> dense sigmoid
    # and dense stores instead of a lane-sparse [TB, 1] epilogue.
    z = jnp.einsum('od,td->ot', w3_ref[...], h2,
                   preferred_element_type=jnp.float32) + b3_ref[0, 0]   # [1, TB]
    sig = jax.nn.sigmoid(z)                                     # [1, TB] f32

    # Scatter the lane-major row into the (rows, TB//rows) output block with
    # static slices (no in-kernel reshape needed).
    rows, cols = o_ref.shape
    for r in range(rows):
        o_ref[r:r + 1, :] = sig[:, r * cols:(r + 1) * cols]


def _round_down(x, m):
    return (x // m) * m


def _pick_tile_and_vmem(batch, d):
    """Choose batch tile TB and vmem_limit_bytes from the hardware VMEM size."""
    try:
        vmem_phys = int(pltpu.get_tpu_info().vmem_capacity_bytes)
    except Exception:  # unknown backend / API -> conservative 64 MiB (v7x-like)
        vmem_phys = 64 * 1024 * 1024
    # v7x (64 MiB physical): cap at 48 MiB. v5e/v6e (128 MiB): allow up to 96 MiB.
    vmem_limit = min(vmem_phys * 3 // 4, 96 * 1024 * 1024)

    if batch < 1024:
        # Single full-array tile; block dims equal array dims so any B is legal.
        return batch, vmem_limit, True

    # Per-batch-row VMEM: double-buffered f32 x row (8*D) + f32/bf16 activations
    # (h1, h2, bf16 copies, fc3 row, output) + compiler temporaries slack.
    resident = d * 128 * 2 + 128 * 64 * 2 + (1 << 16)   # bf16 w1, w2 + small arrays
    budget = max(vmem_limit // 2 - resident, 1 << 20)
    per_row = 8 * d + 2048
    tb = max(_round_down(budget // per_row, 1024), 1024)
    tb = min(tb, 8192)                                   # review: <= ~8192 for small D

    if batch >= 2048:
        # Keep >= 2 grid steps so dimension_semantics=("parallel",) can use both
        # TensorCores on v7x, but never shrink below the 1024 granularity.
        tb = min(tb, max(1024, _round_down(batch // 2, 1024)))
    else:
        tb = 1024
    tb = min(tb, _round_down(batch, 1024))               # never exceed the array
    return tb, vmem_limit, False


@jax.jit
def dream_network_forward(x, w1, b1, w2, b2, w3, b3):
    """x: [B, D].  Weights stored as [in, out] (transpose of torch's [out, in])."""
    B, D = x.shape
    tb, vmem_limit, small = _pick_tile_and_vmem(B, D)
    num_tiles = 1 if small else pl.cdiv(B, tb)
    grid = (num_tiles,)

    w1_bf = w1.astype(jnp.bfloat16)                      # [D, 128] resident
    w2_bf = w2.astype(jnp.bfloat16)                      # [128, 64] resident
    w3_row = w3.reshape(1, 64).astype(jnp.float32)       # [1, 64] (fc3 kept f32)
    b1_r = b1.reshape(1, 128).astype(jnp.float32)
    b2_r = b2.reshape(1, 64).astype(jnp.float32)
    b3_s = b3.reshape(1, 1).astype(jnp.float32)          # scalar via SMEM

    if small:
        out_shape = jax.ShapeDtypeStruct((1, tb), jnp.float32)
        out_spec = pl.BlockSpec((1, tb), lambda i: (0, 0))
    else:
        # Lane-dense, (8,128)-aligned output slab: tile i owns rows [8i, 8i+8).
        out_shape = jax.ShapeDtypeStruct((num_tiles * 8, tb // 8), jnp.float32)
        out_spec = pl.BlockSpec((8, tb // 8), lambda i: (i, 0))

    b_total = num_tiles * tb
    flops = 2 * b_total * (D * 128 + 128 * 64 + 64)
    bytes_accessed = (x.size * x.dtype.itemsize + b_total * 4
                      + w1_bf.size * 2 + w2_bf.size * 2
                      + (b1_r.size + b2_r.size + w3_row.size + 1) * 4)

    out = pl.pallas_call(
        _mlp_kernel,
        out_shape=out_shape,
        grid=grid,
        in_specs=[
            pl.BlockSpec((tb, D), lambda i: (i, 0)),            # x: pipelined batch tiles
            pl.BlockSpec((D, 128), lambda i: (0, 0)),           # w1: resident
            pl.BlockSpec((1, 128), lambda i: (0, 0)),           # b1: resident
            pl.BlockSpec((128, 64), lambda i: (0, 0)),          # w2: resident
            pl.BlockSpec((1, 64), lambda i: (0, 0)),            # b2: resident
            pl.BlockSpec((1, 64), lambda i: (0, 0)),            # w3 row: resident
            pl.BlockSpec(memory_space=pltpu.MemorySpace.SMEM),  # b3: scalar in SMEM
        ],
        out_specs=out_spec,
        compiler_params=pltpu.CompilerParams(
            dimension_semantics=("parallel",),                  # 2 TCs on v7x
            vmem_limit_bytes=vmem_limit),
        cost_estimate=pl.CostEstimate(
            flops=flops, transcendentals=b_total, bytes_accessed=bytes_accessed),
    )(x, w1_bf, b1_r, w2_bf, b2_r, w3_row, b3_s)

    # Flat order of the output slab == batch order; slice off ragged-tail padding.
    return out.reshape(-1)[:B].reshape(B, 1)


def init_params(key, input_dim):
    """Deterministic init matching the torch module's layer shapes.

    fc1: (input_dim -> 128), fc2: (128 -> 64), fc3: (64 -> 1).
    Weights stored as [in, out] (transpose of torch's [out, in]).
    """
    k1, k2, k3, k4, k5, k6 = jax.random.split(key, 6)

    def uinit(k, fan_in, shape):
        bound = 1.0 / jnp.sqrt(float(fan_in))
        return jax.random.uniform(k, shape, jnp.float32, -bound, bound)

    w1 = uinit(k1, input_dim, (input_dim, 128))
    b1 = uinit(k2, input_dim, (1, 128))
    w2 = uinit(k3, 128, (128, 64))
    b2 = uinit(k4, 128, (1, 64))
    w3 = uinit(k5, 64, (64, 1))
    b3 = uinit(k6, 64, (1, 1))
    return w1, b1, w2, b2, w3, b3


def reference_forward(x, w1, b1, w2, b2, w3, b3):
    h1 = jax.nn.relu(x @ w1 + b1)
    h2 = jax.nn.relu(h1 @ w2 + b2)
    return jax.nn.sigmoid(h2 @ w3 + b3)


if __name__ == "__main__":
    key = jax.random.PRNGKey(0)
    kx, kp, kx2 = jax.random.split(key, 3)

    input_dim = 32
    params = init_params(kp, input_dim)

    # Small batch: single full-array tile path.
    x_small = jax.random.normal(kx, (8, input_dim), jnp.float32)
    out_small = jax.block_until_ready(dream_network_forward(x_small, *params))
    ref_small = reference_forward(x_small, *params)
    assert out_small.shape == (8, 1), out_small.shape
    assert jnp.allclose(out_small, ref_small, atol=3e-2, rtol=3e-2), (
        f"small-batch max abs err {jnp.max(jnp.abs(out_small - ref_small))}"
    )

    # Moderate batch: tiled path with a ragged last tile (grid=3, TB=1024).
    x_big = jax.random.normal(kx2, (2500, input_dim), jnp.float32)
    out_big = jax.block_until_ready(dream_network_forward(x_big, *params))
    ref_big = reference_forward(x_big, *params)
    assert out_big.shape == (2500, 1), out_big.shape
    assert jnp.allclose(out_big, ref_big, atol=3e-2, rtol=3e-2), (
        f"tiled-batch max abs err {jnp.max(jnp.abs(out_big - ref_big))}"
    )

    print("KERNEL_OK")
</pallas_src>

<mosaic_0001>
module attributes {stable_mosaic.version = 11 : i64} {
  func.func @_mlp_kernel(%arg0: i32, %arg1: memref<8x32xf32, #tpu.memory_space<vmem>>, %arg2: memref<32x128xbf16, #tpu.memory_space<vmem>>, %arg3: memref<1x128xf32, #tpu.memory_space<vmem>>, %arg4: memref<128x64xbf16, #tpu.memory_space<vmem>>, %arg5: memref<1x64xf32, #tpu.memory_space<vmem>>, %arg6: memref<1x64xf32, #tpu.memory_space<vmem>>, %arg7: memref<1x1xf32, #tpu.memory_space<smem>>, %arg8: memref<1x8xf32, #tpu.memory_space<vmem>>) attributes {dimension_semantics = [#tpu.dimension_semantics<parallel>], iteration_bounds = array<i64: 1>, scalar_prefetch = 0 : i64, scratch_operands = 0 : i64, tpu.core_type = #tpu.core_type<tc>, window_params = [{transform_indices = @transform_0, window_bounds = array<i64: 8, 32>}, {pipeline_mode = #tpu.pipeline_mode<synchronous>, transform_indices = @transform_1, window_bounds = array<i64: 32, 128>}, {pipeline_mode = #tpu.pipeline_mode<synchronous>, transform_indices = @transform_2, window_bounds = array<i64: 1, 128>}, {pipeline_mode = #tpu.pipeline_mode<synchronous>, transform_indices = @transform_3, window_bounds = array<i64: 128, 64>}, {pipeline_mode = #tpu.pipeline_mode<synchronous>, transform_indices = @transform_4, window_bounds = array<i64: 1, 64>}, {pipeline_mode = #tpu.pipeline_mode<synchronous>, transform_indices = @transform_5, window_bounds = array<i64: 1, 64>}, {transform_indices = @transform_6, window_bounds = array<i64: 1, 1>}, {pipeline_mode = #tpu.pipeline_mode<synchronous>, transform_indices = @transform_7, window_bounds = array<i64: 1, 8>}]} {
    %c0 = arith.constant 0 : index
    %c0_0 = arith.constant 0 : index
    %0 = vector.load %arg1[%c0, %c0_0] : memref<8x32xf32, #tpu.memory_space<vmem>>, vector<8x32xf32>
    %1 = arith.truncf %0 : vector<8x32xf32> to vector<8x32xbf16>
    %c0_1 = arith.constant 0 : index
    %c0_2 = arith.constant 0 : index
    %2 = vector.load %arg2[%c0_1, %c0_2] : memref<32x128xbf16, #tpu.memory_space<vmem>>, vector<32x128xbf16>
    %cst = arith.constant dense<0.000000e+00> : vector<8x128xf32>
    %3 = tpu.matmul %1, %2, %cst {dimension_numbers = #tpu.dot_dimension_numbers<[1], [0], [0], [1], [0, 0, 1, 1], [], []>} : vector<8x32xbf16>, vector<32x128xbf16>, vector<8x128xf32> -> vector<8x128xf32>
    %c0_3 = arith.constant 0 : index
    %c0_4 = arith.constant 0 : index
    %4 = vector.load %arg3[%c0_3, %c0_4] : memref<1x128xf32, #tpu.memory_space<vmem>>, vector<1x128xf32>
    %5 = vector.broadcast %4 : vector<1x128xf32> to vector<8x128xf32>
    %6 = arith.addf %3, %5 : vector<8x128xf32>
    %cst_5 = arith.constant 0.000000e+00 : f32
    %7 = vector.broadcast %cst_5 : f32 to vector<8x128xf32>
    %8 = arith.maximumf %6, %7 : vector<8x128xf32>
    %9 = arith.truncf %8 : vector<8x128xf32> to vector<8x128xbf16>
    %c0_6 = arith.constant 0 : index
    %c0_7 = arith.constant 0 : index
    %10 = vector.load %arg4[%c0_6, %c0_7] : memref<128x64xbf16, #tpu.memory_space<vmem>>, vector<128x64xbf16>
    %cst_8 = arith.constant dense<0.000000e+00> : vector<8x64xf32>
    %11 = tpu.matmul %9, %10, %cst_8 {dimension_numbers = #tpu.dot_dimension_numbers<[1], [0], [0], [1], [0, 0, 1, 1], [], []>} : vector<8x128xbf16>, vector<128x64xbf16>, vector<8x64xf32> -> vector<8x64xf32>
    %c0_9 = arith.constant 0 : index
    %c0_10 = arith.constant 0 : index
    %12 = vector.load %arg5[%c0_9, %c0_10] : memref<1x64xf32, #tpu.memory_space<vmem>>, vector<1x64xf32>
    %13 = vector.broadcast %12 : vector<1x64xf32> to vector<8x64xf32>
    %14 = arith.addf %11, %13 : vector<8x64xf32>
    %cst_11 = arith.constant 0.000000e+00 : f32
    %15 = vector.broadcast %cst_11 : f32 to vector<8x64xf32>
    %16 = arith.maximumf %14, %15 : vector<8x64xf32>
    %c0_12 = arith.constant 0 : index
    %c0_13 = arith.constant 0 : index
    %17 = vector.load %arg6[%c0_12, %c0_13] : memref<1x64xf32, #tpu.memory_space<vmem>>, vector<1x64xf32>
    "tpu.trace_start"() <{level = 10 : i32, message = "od,td->ot"}> : () -> ()
    %cst_14 = arith.constant dense<0.000000e+00> : vector<1x8xf32>
    %18 = tpu.matmul %17, %16, %cst_14 {dimension_numbers = #tpu.dot_dimension_numbers<[1], [1], [0], [0], [0, 0, 1, 0], [], []>} : vector<1x64xf32>, vector<8x64xf32>, vector<1x8xf32> -> vector<1x8xf32>
    "tpu.trace_stop"() : () -> ()
    %c0_15 = arith.constant 0 : index
    %c0_16 = arith.constant 0 : index
    %19 = memref.load %arg7[%c0_15, %c0_16] : memref<1x1xf32, #tpu.memory_space<smem>>
    %20 = vector.broadcast %19 : f32 to vector<1x8xf32>
    %21 = arith.addf %18, %20 : vector<1x8xf32>
    %22 = arith.negf %21 : vector<1x8xf32>
    %23 = math.exp %22 : vector<1x8xf32>
    %cst_17 = arith.constant 1.000000e+00 : f32
    %24 = vector.broadcast %cst_17 : f32 to vector<1x8xf32>
    %25 = arith.addf %24, %23 : vector<1x8xf32>
    %26 = arith.divf %24, %25 : vector<1x8xf32>
    %c0_18 = arith.constant 0 : index
    %c0_19 = arith.constant 0 : index
    %27 = vector.load %arg8[%c0_18, %c0_19] : memref<1x8xf32, #tpu.memory_space<vmem>>, vector<1x8xf32>
    tpu.vector_store %arg8[%c0_18, %c0_19], %26 {strides = array<i32>} : memref<1x8xf32, #tpu.memory_space<vmem>>, vector<1x8xf32>,
    return
  }
  func.func @transform_0(%arg0: i32) -> (i32, i32) {
    %c0_i32 = arith.constant 0 : i32
    %c0_i32_0 = arith.constant 0 : i32
    return %arg0, %c0_i32 : i32, i32
  }
  func.func @transform_1(%arg0: i32) -> (i32, i32) {
    %c0_i32 = arith.constant 0 : i32
    %c0_i32_0 = arith.constant 0 : i32
    %c0_i32_1 = arith.constant 0 : i32
    return %c0_i32, %c0_i32_0 : i32, i32
  }
  func.func @transform_2(%arg0: i32) -> (i32, i32) {
    %c0_i32 = arith.constant 0 : i32
    %c0_i32_0 = arith.constant 0 : i32
    %c0_i32_1 = arith.constant 0 : i32
    return %c0_i32, %c0_i32_0 : i32, i32
  }
  func.func @transform_3(%arg0: i32) -> (i32, i32) {
    %c0_i32 = arith.constant 0 : i32
    %c0_i32_0 = arith.constant 0 : i32
    %c0_i32_1 = arith.constant 0 : i32
    return %c0_i32, %c0_i32_0 : i32, i32
  }
  func.func @transform_4(%arg0: i32) -> (i32, i32) {
    %c0_i32 = arith.constant 0 : i32
    %c0_i32_0 = arith.constant 0 : i32
    %c0_i32_1 = arith.constant 0 : i32
    return %c0_i32, %c0_i32_0 : i32, i32
  }
  func.func @transform_5(%arg0: i32) -> (i32, i32) {
    %c0_i32 = arith.constant 0 : i32
    %c0_i32_0 = arith.constant 0 : i32
    %c0_i32_1 = arith.constant 0 : i32
    return %c0_i32, %c0_i32_0 : i32, i32
  }
  func.func @transform_6(%arg0: i32) -> (i32, i32) {
    %c0_i32 = arith.constant 0 : i32
    %c0_i32_0 = arith.constant 0 : i32
    %c0_i32_1 = arith.constant 0 : i32
    return %c0_i32, %c0_i32_0 : i32, i32
  }
  func.func @transform_7(%arg0: i32) -> (i32, i32) {
    %c0_i32 = arith.constant 0 : i32
    %c0_i32_0 = arith.constant 0 : i32
    %c0_i32_1 = arith.constant 0 : i32
    return %c0_i32, %c0_i32_0 : i32, i32
  }
}

</mosaic_0001>

<llo_original>
// kernel: dream_network_forward.1
$region0: #{dream_network_forward.1}
  #allocation0 [shape = 'u32[]', space=smem, size = 0x4, offset = 0x4, fixed_abs, tag = 'smem constant byte address 0x4 - core index']
  #allocation1 [shape = 'u32[144,128]{1,0:T(1,128)}', space=vmem, size = 0x12000, scoped, tag = 'internal scratch']
  #allocation2 [shape = 'f32[1,1]{1,0:T(1,128)S(6)}', space=smem, size = 0x200, scoped, tag = 'scoped memory for dream_network_forward.1']
  %s0 = inlined_call_operand.vmem [shape: f32[8,32], index: 0, kind: input, shape index: {}]
  %s1 = inlined_call_operand.vmem [shape: bf16[32,128], index: 1, kind: input, shape index: {}]
  %s2 = inlined_call_operand.vmem [shape: f32[1,128], index: 2, kind: input, shape index: {}]
  %s3 = inlined_call_operand.vmem [shape: bf16[128,64], index: 3, kind: input, shape index: {}]
  %s4 = inlined_call_operand.vmem [shape: f32[1,64], index: 4, kind: input, shape index: {}]
  %s5 = inlined_call_operand.vmem [shape: f32[1,64], index: 5, kind: input, shape index: {}]
  %s6 = inlined_call_operand.<no memory space> [shape: f32[1,1], index: 6, kind: input, shape index: {}]
  %s7 = inlined_call_operand.hbm [shape: f32[1,8], index: 7, kind: output, shape index: {}]
  %s8 = sld [smem:[#allocation0]]
  $region38: #{dream_network_forward.1} parent=0
    _
  %s10 = ssub.s32 1, %s8
  %s11 = scalar_select 0, %s10, %s8
  %12 = sst [smem:[#allocation2]] %s6
  $region1: #{dream_network_forward.1} parent=0
    #allocation3 [shape = 'u8[512]{0}', space=vmem, size = 0x400, scoped, tag = 'output window, operand 0, single buffered']
    #allocation4 [shape = 's32[1]{0}', space=sflag, size = 0x4, scoped, tag = 'scoped memory for dream_network_forward.1']
    %13 = vsyncpa [#allocation4], 0
    // Predicated region
    $region2: #{dream_network_forward.1} parent=1 // pred_check
      _
    $region3: #{dream_network_forward.1} parent=1 // pred_check_branch
      %15 = sbr.rel (0) target = $region5
    $region4: #{dream_network_forward.1} parent=1 // pred_region
      _
    $region5: #{dream_network_forward.1} parent=1 // pred_fallthru
      _
    // Predicated region
    $region6: #{dream_network_forward.1} parent=1 // pred_check
      _
    $region7: #{dream_network_forward.1} parent=1 // pred_check_branch
      %17 = sbr.rel (0) target = $region9
    $region8: #{dream_network_forward.1} parent=1 // pred_region
      _
    $region9: #{dream_network_forward.1} parent=1 // pred_fallthru
      _
    // Predicated region
    $region10: #{dream_network_forward.1} parent=1 // pred_check
      _
    $region11: #{dream_network_forward.1} parent=1 // pred_check_branch
      %19 = sbr.rel (0) target = $region13
    $region12: #{dream_network_forward.1} parent=1 // pred_region
      _
    $region13: #{dream_network_forward.1} parent=1 // pred_fallthru
      _
    // Predicated region
    $region14: #{dream_network_forward.1} parent=1 // pred_check
      _
    $region15: #{dream_network_forward.1} parent=1 // pred_check_branch
      %21 = sbr.rel (0) target = $region17
    $region16: #{dream_network_forward.1} parent=1 // pred_region
      _
    $region17: #{dream_network_forward.1} parent=1 // pred_fallthru
      _
    // Predicated region
    $region18: #{dream_network_forward.1} parent=1 // pred_check
      _
    $region19: #{dream_network_forward.1} parent=1 // pred_check_branch
      %23 = sbr.rel (0) target = $region21
    $region20: #{dream_network_forward.1} parent=1 // pred_region
      _
    $region21: #{dream_network_forward.1} parent=1 // pred_fallthru
      _
    // Predicated region
    $region22: #{dream_network_forward.1} parent=1 // pred_check
      _
    $region23: #{dream_network_forward.1} parent=1 // pred_check_branch
      %25 = sbr.rel (0) target = $region25
    $region24: #{dream_network_forward.1} parent=1 // pred_region
      _
    $region25: #{dream_network_forward.1} parent=1 // pred_fallthru
      _
    // Predicated region
    $region26: #{dream_network_forward.1} parent=1 // pred_check
      _
    $region27: #{dream_network_forward.1} parent=1 // pred_check_branch
      %27 = sbr.rel (0) target = $region29
    $region28: #{dream_network_forward.1} parent=1 // pred_region
      _
    $region29: #{dream_network_forward.1} parent=1 // pred_fallthru
      _
    %v29 = vld [vmem:[%s0] sm:$0xff]
    %v30 = vpack.c.bf16 %v29, %v29
    %v31 = vld [vmem:[%s1] sm:$0xf]
    %v32 = vld [vmem:[%s1 + $0x4] sm:$0xf]
    %v33 = vld [vmem:[%s1 + $0x8] sm:$0xf]
    %v34 = vld [vmem:[%s1 + $0xc] sm:$0xf]
    %v35 = vld [vmem:[%s2] sm:$0x1]
    %v37 = vlaneseq
    %v38 = vshrl.u32 %v37, 7
    %v39 = vsub.s32 0, %v38
    %v40 = vrot.slane %v35, %v39
    %v46 = vunpack.c.l.b16 %v31
    %v47 = vunpack.c.l.b16 %v32
    %v48 = vunpack.c.l.b16 %v33
    %v49 = vunpack.c.l.b16 %v34
    %v50 = vpack.c.b16 %v47, %v46
    %v51 = vpack.c.b16 %v49, %v48
    %vm54 = vcmask 261120
    %v56 = vsel %vm54, %v30, 0
    %58 = vmatprep.subr.bf16.mxu0 0
    %59 = vmatpush1.bf16.msra.mxu0 %v50
    %60 = vmatprep.subr.bf16.mxu0 0
    %61 = vmatpush1.bf16.msra.mxu0 %v51
    %62 = vmatprep.subr.bf16.mxu0 0
    %63 = vmatpush1.bf16.msra.mxu0 0
    %64 = vmatprep.subr.bf16.mxu0 0
    %65 = vmatpush1.bf16.msra.mxu0 0
    %66 = vmatprep.subr.bf16.mxu0 0
    %67 = vmatpush1.bf16.msra.mxu0 0
    %68 = vmatprep.subr.bf16.mxu0 0
    %69 = vmatpush1.bf16.msra.mxu0 0
    %70 = vmatprep.subr.bf16.mxu0 0
    %71 = vmatpush1.bf16.msra.mxu0 0
    %72 = vmatprep.subr.bf16.mxu0 0
    %73 = vmatpush1.bf16.msra.mxu0 0
    %74 = vmatprep.subr.bf16.mxu0 0
    %75 = vmatpush1.bf16.msra.mxu0 0
    %76 = vmatprep.subr.bf16.mxu0 0
    %77 = vmatpush1.bf16.msra.mxu0 0
    %78 = vmatprep.subr.bf16.mxu0 0
    %79 = vmatpush1.bf16.msra.mxu0 0
    %80 = vmatprep.subr.bf16.mxu0 0
    %81 = vmatpush1.bf16.msra.mxu0 0
    %82 = vmatprep.subr.bf16.mxu0 0
    %83 = vmatpush1.bf16.msra.mxu0 0
    %84 = vmatprep.subr.bf16.mxu0 0
    %85 = vmatpush1.bf16.msra.mxu0 0
    %86 = vmatprep.subr.bf16.mxu0 0
    %87 = vmatpush1.bf16.msra.mxu0 0
    %88 = vmatprep.subr.bf16.mxu0 0
    %89 = vmatpush1.bf16.msra.mxu0 0
    %90 = vmatprep.mubr.bf16.mxu0 0
    %91 = vmatmul.mubr.bf16.gmra.mrb[0].mxu0 %v56
    %v92 = vpop.f32.mrb[0].mxu0
    %v93 = vadd.f32 %v40, %v92
    %v94 = vpop.f32.mrb[0].mxu0
    %v95 = vpop.f32.mrb[0].mxu0
    %v96 = vpop.f32.mrb[0].mxu0
    %97 = vdwg.mxu0
    %v98 = vmax.f32 %v93, 0.0
    %v99 = vpack.c.bf16 %v98, %v98
    %v100 = vld [vmem:[%s3] sm:$0xf]
    %v101 = vld [vmem:[%s3 + $0x4] sm:$0xf]
    %v102 = vld [vmem:[%s3 + $0x8] sm:$0xf]
    %v103 = vld [vmem:[%s3 + $0xc] sm:$0xf]
    %v104 = vld [vmem:[%s3 + $0x10] sm:$0xf]
    %v105 = vld [vmem:[%s3 + $0x14] sm:$0xf]
    %v106 = vld [vmem:[%s3 + $0x18] sm:$0xf]
    %v107 = vld [vmem:[%s3 + $0x1c] sm:$0xf]
    %v108 = vld [vmem:[%s3 + $0x20] sm:$0xf]
    %v109 = vld [vmem:[%s3 + $0x24] sm:$0xf]
    %v110 = vld [vmem:[%s3 + $0x28] sm:$0xf]
    %v111 = vld [vmem:[%s3 + $0x2c] sm:$0xf]
    %v112 = vld [vmem:[%s3 + $0x30] sm:$0xf]
    %v113 = vld [vmem:[%s3 + $0x34] sm:$0xf]
    %v114 = vld [vmem:[%s3 + $0x38] sm:$0xf]
    %v115 = vld [vmem:[%s3 + $0x3c] sm:$0xf]
    %v116 = vld [vmem:[%s4] sm:$0x1]
    %v118 = vlaneseq
    %v119 = vshrl.u32 %v118, 7
    %v120 = vsub.s32 0, %v119
    %v121 = vrot.slane %v116, %v120
    %v139 = vunpack.c.l.b16 %v100
    %v140 = vunpack.c.l.b16 %v101
    %v141 = vunpack.c.l.b16 %v102
    %v142 = vunpack.c.l.b16 %v103
    %v143 = vunpack.c.l.b16 %v104
    %v144 = vunpack.c.l.b16 %v105
    %v145 = vunpack.c.l.b16 %v106
    %v146 = vunpack.c.l.b16 %v107
    %v147 = vunpack.c.l.b16 %v108
    %v148 = vunpack.c.l.b16 %v109
    %v149 = vunpack.c.l.b16 %v110
    %v150 = vunpack.c.l.b16 %v111
    %v151 = vunpack.c.l.b16 %v112
    %v152 = vunpack.c.l.b16 %v113
    %v153 = vunpack.c.l.b16 %v114
    %v154 = vunpack.c.l.b16 %v115
    %v155 = vpack.c.b16 %v140, %v139
    %v156 = vpack.c.b16 %v142, %v141
    %v157 = vpack.c.b16 %v144, %v143
    %v158 = vpack.c.b16 %v146, %v145
    %v159 = vpack.c.b16 %v148, %v147
    %v160 = vpack.c.b16 %v150, %v149
    %v161 = vpack.c.b16 %v152, %v151
    %v162 = vpack.c.b16 %v154, %v153
    %171 = vmatprep.subr.bf16.mxu0 0
    %172 = vmatpush1.bf16.msra.mxu0 %v155
    %173 = vmatprep.subr.bf16.mxu0 0
    %174 = vmatpush1.bf16.msra.mxu0 %v156
    %175 = vmatprep.subr.bf16.mxu0 0
    %176 = vmatpush1.bf16.msra.mxu0 %v157
    %177 = vmatprep.subr.bf16.mxu0 0
    %178 = vmatpush1.bf16.msra.mxu0 %v158
    %179 = vmatprep.subr.bf16.mxu0 0
    %180 = vmatpush1.bf16.msra.mxu0 %v159
    %181 = vmatprep.subr.bf16.mxu0 0
    %182 = vmatpush1.bf16.msra.mxu0 %v160
    %183 = vmatprep.subr.bf16.mxu0 0
    %184 = vmatpush1.bf16.msra.mxu0 %v161
    %185 = vmatprep.subr.bf16.mxu0 0
    %186 = vmatpush1.bf16.msra.mxu0 %v162
    %187 = vmatprep.subr.bf16.mxu0 0
    %188 = vmatpush1.bf16.msra.mxu0 0
    %189 = vmatprep.subr.bf16.mxu0 0
    %190 = vmatpush1.bf16.msra.mxu0 0
    %191 = vmatprep.subr.bf16.mxu0 0
    %192 = vmatpush1.bf16.msra.mxu0 0
    %193 = vmatprep.subr.bf16.mxu0 0
    %194 = vmatpush1.bf16.msra.mxu0 0
    %195 = vmatprep.subr.bf16.mxu0 0
    %196 = vmatpush1.bf16.msra.mxu0 0
    %197 = vmatprep.subr.bf16.mxu0 0
    %198 = vmatpush1.bf16.msra.mxu0 0
    %199 = vmatprep.subr.bf16.mxu0 0
    %200 = vmatpush1.bf16.msra.mxu0 0
    %201 = vmatprep.subr.bf16.mxu0 0
    %202 = vmatpush1.bf16.msra.mxu0 0
    %203 = vmatprep.mubr.bf16.mxu0 0
    %204 = vmatmul.mubr.bf16.gmra.mrb[0].mxu0 %v99
    %v205 = vpop.f32.mrb[0].mxu0
    %v206 = vadd.f32 %v121, %v205
    %v207 = vpop.f32.mrb[0].mxu0
    %v208 = vpop.f32.mrb[0].mxu0
    %v209 = vpop.f32.mrb[0].mxu0
    %210 = vdwg.mxu0
    %v211 = vmax.f32 %v206, 0.0
    %v212 = vld [vmem:[%s5] sm:$0x1]
    %s213 = sld [smem:[#allocation2]]
    %v214 = vstv %s213
    %vm215 = vcmask 523264
    %v217 = vsel %vm215, %v212, 0
    %v220 = vsel %vm215, %v211, 0
    %222 = vmatprep.subr.mxu0 0.0
    %223 = vmatpush1.xpose.msra.mxu0 %v220
    %224 = vmatprep.subr.mxu0 0.0
    %225 = vmatpush1.xpose.msra.mxu0 0.0
    %226 = vmatprep.subr.mxu0 0.0
    %227 = vmatpush1.xpose.msra.mxu0 0.0
    %228 = vmatprep.subr.mxu0 0.0
    %229 = vmatpush1.xpose.msra.mxu0 0.0
    %230 = vmatprep.subr.mxu0 0.0
    %231 = vmatpush1.xpose.msra.mxu0 0.0
    %232 = vmatprep.subr.mxu0 0.0
    %233 = vmatpush1.xpose.msra.mxu0 0.0
    %234 = vmatprep.subr.mxu0 0.0
    %235 = vmatpush1.xpose.msra.mxu0 0.0
    %236 = vmatprep.subr.mxu0 0.0
    %237 = vmatpush1.xpose.msra.mxu0 0.0
    %238 = vmatprep.subr.mxu0 0.0
    %239 = vmatpush1.xpose.msra.mxu0 0.0
    %240 = vmatprep.subr.mxu0 0.0
    %241 = vmatpush1.xpose.msra.mxu0 0.0
    %242 = vmatprep.subr.mxu0 0.0
    %243 = vmatpush1.xpose.msra.mxu0 0.0
    %244 = vmatprep.subr.mxu0 0.0
    %245 = vmatpush1.xpose.msra.mxu0 0.0
    %246 = vmatprep.subr.mxu0 0.0
    %247 = vmatpush1.xpose.msra.mxu0 0.0
    %248 = vmatprep.subr.mxu0 0.0
    %249 = vmatpush1.xpose.msra.mxu0 0.0
    %250 = vmatprep.subr.mxu0 0.0
    %251 = vmatpush1.xpose.msra.mxu0 0.0
    %252 = vmatprep.subr.mxu0 0.0
    %253 = vmatpush1.xpose.msra.mxu0 0.0
    %254 = vmatprep.subr.mxu0 0.0
    %255 = vmatpush1.xpose.msra.mxu0 0.0
    %256 = vmatprep.subr.mxu0 0.0
    %257 = vmatpush1.xpose.msra.mxu0 0.0
    %258 = vmatprep.subr.mxu0 0.0
    %259 = vmatpush1.xpose.msra.mxu0 0.0
    %260 = vmatprep.subr.mxu0 0.0
    %261 = vmatpush1.xpose.msra.mxu0 0.0
    %262 = vmatprep.subr.mxu0 0.0
    %263 = vmatpush1.xpose.msra.mxu0 0.0
    %264 = vmatprep.subr.mxu0 0.0
    %265 = vmatpush1.xpose.msra.mxu0 0.0
    %266 = vmatprep.subr.mxu0 0.0
    %267 = vmatpush1.xpose.msra.mxu0 0.0
    %268 = vmatprep.subr.mxu0 0.0
    %269 = vmatpush1.xpose.msra.mxu0 0.0
    %270 = vmatprep.subr.mxu0 0.0
    %271 = vmatpush1.xpose.msra.mxu0 0.0
    %272 = vmatprep.subr.mxu0 0.0
    %273 = vmatpush1.xpose.msra.mxu0 0.0
    %274 = vmatprep.subr.mxu0 0.0
    %275 = vmatpush1.xpose.msra.mxu0 0.0
    %276 = vmatprep.subr.mxu0 0.0
    %277 = vmatpush1.xpose.msra.mxu0 0.0
    %278 = vmatprep.subr.mxu0 0.0
    %279 = vmatpush1.xpose.msra.mxu0 0.0
    %280 = vmatprep.subr.mxu0 0.0
    %281 = vmatpush1.xpose.msra.mxu0 0.0
    %282 = vmatprep.subr.mxu0 0.0
    %283 = vmatpush1.xpose.msra.mxu0 0.0
    %284 = vmatprep.subr.mxu0 0.0
    %285 = vmatpush1.xpose.msra.mxu0 0.0
    %286 = vmatprep.mubr.f32.mxu0 0.0
    %287 = vmatmul.mubr.f32.gmra.mrb[0].mxu0 %v217
    %v288 = vpop.f32.mrb[0].mxu0
    %v289 = vadd.f32 %v214, %v288
    %v290 = vpop.f32.mrb[0].mxu0
    %291 = vdwg.mxu0
    %v292 = vxor.u32 %v289, 2147483648
    %v293 = vmul.f32 %v292, 1.442695
    %v294 = vpow.pop %v293
    %v295 = vadd.f32 %v294, 1.0
    %v296 = vrcp.pop %v295
    %v297 = vmul.f32 1.0, %v296
    %vm298 = vcmask 57344
    %299 = vst.msk [vmem:[#allocation3] sm:$0x1] %vm298, %v297
    // Predicated region
    $region30: #{dream_network_forward.1} parent=1 // pred_check
      _
    $region31: #{dream_network_forward.1} parent=1 // pred_check_branch
      %301 = sbr.rel (0) target = $region33
    $region32: #{dream_network_forward.1} parent=1 // pred_region
      %s303 = ssub.s32 16, 16
      %304 = vsyncadd [#allocation4], %s303
      %s306 = sshll.u32 [#allocation3], 4
      %s307 = int_to_ptr.vmem [resolvable:$true] %s306
      %309 = dma.vmem_to_hbm [thread:$0]  %s307, 16, %s7, [#allocation4]
    $region33: #{dream_network_forward.1} parent=1 // pred_fallthru
      _
    // Predicated region
    $region34: #{dream_network_forward.1} parent=1 // pred_check
      _
    $region35: #{dream_network_forward.1} parent=1 // pred_check_branch
      %311 = sbr.rel (0) target = $region37
    $region36: #{dream_network_forward.1} parent=1 // pred_region
      %312 = dma.done [#allocation4], 16
    $region37: #{dream_network_forward.1} parent=1 // pred_fallthru
      _
    %313 = vsyncpa [#allocation4], 1

</llo_original>
